<compile_context>
chip_gen: v7x
topology: tpu7x:2x2x1
jax: 0.10.0
libtpu: 0.0.40
codegen_flags: <defaults>
</compile_context>

<pallas_src>
import functools
import math

import jax
import jax.numpy as jnp
from jax.experimental import pallas as pl
from jax.experimental.pallas import tpu as pltpu

LANES = 128
_LN10 = math.log(10.0)
# epsilon**2 = 10 ** (-2*(10*w - 1)/3) = exp(_C1 * w + _C2)
_C1 = -20.0 * _LN10 / 3.0
_C2 = 2.0 * _LN10 / 3.0


def _default_num_splits():
    """2 on v7x (2 TensorCores/chip), 1 on v5e/v6e (1 TC)."""
    try:
        kind = jax.devices()[0].device_kind.lower()
    except Exception:
        return 1
    return 2 if "v7" in kind else 1


def _charbonnier_kernel(diff_ref, w_ref, out_ref, *, n_strips, strip):
    # The output block index is constant along the reduction (j) axis, so the
    # (1, strip, LANES) block stays VMEM-resident and acts as the accumulator.
    @pl.when(pl.program_id(1) == 0)
    def _():
        out_ref[...] = jnp.zeros_like(out_ref)

    # Strip loop: bounded temporaries + many independent accumulation chains.
    @pl.loop(0, n_strips)
    def _(s):
        r0 = pl.multiple_of(s * strip, strip)
        d = diff_ref[pl.ds(r0, strip), :].astype(jnp.float32)
        w = w_ref[pl.ds(r0, strip), :].astype(jnp.float32)
        alpha = w * 0.5
        eps2 = jnp.exp(w * _C1 + _C2)                   # epsilon**2 in one EUP exp
        val = jnp.exp(alpha * jnp.log(d * d + eps2))    # (d^2 + eps^2) ** alpha
        out_ref[0, :, :] += val


def charbonnier_ada(diff, weight, *, row_tile=8192, strip=512, num_splits=None):
    """Pallas implementation of Charbonnier_Ada.forward. Returns a scalar."""
    assert diff.shape == weight.shape, "kernel assumes same-shaped diff/weight"
    n = diff.size
    if num_splits is None:
        num_splits = _default_num_splits()

    d_flat = diff.reshape(-1)   # contiguous flatten: no copy
    w_flat = weight.reshape(-1)

    rows_full = n // LANES                              # whole 128-lane rows

    # Per-split row budget (multiple of 8 sublanes).
    per_split_rows = (rows_full // num_splits // 8) * 8
    if per_split_rows == 0 and num_splits > 1:
        num_splits = 1
        per_split_rows = (rows_full // 8) * 8

    total = jnp.zeros((), jnp.float32)
    n_main = 0

    if per_split_rows > 0:
        # Inner strip rows (multiple of 8, capped by the per-split budget).
        st = min(max((strip // 8) * 8, 8), per_split_rows)
        # Block rows: multiple of st, at most the request and the budget.
        rt = min(max((row_tile // st) * st, st), (per_split_rows // st) * st)
        steps = rows_full // (num_splits * rt)          # >= 1 by construction
        rows_main = num_splits * steps * rt
        n_main = rows_main * LANES

        d2 = d_flat[:n_main].reshape(rows_main, LANES)
        w2 = w_flat[:n_main].reshape(rows_main, LANES)

        kernel = functools.partial(_charbonnier_kernel,
                                   n_strips=rt // st, strip=st)
        in_map = lambda s, j: (s * steps + j, 0)

        in_block_bytes = rt * LANES * (diff.dtype.itemsize + weight.dtype.itemsize)
        vmem_limit = int(min(64 * 2**20, max(32 * 2**20, 3 * in_block_bytes)))

        partials = pl.pallas_call(
            kernel,
            out_shape=jax.ShapeDtypeStruct((num_splits, st, LANES), jnp.float32),
            grid_spec=pltpu.PrefetchScalarGridSpec(
                num_scalar_prefetch=0,
                grid=(num_splits, steps),
                in_specs=[
                    pl.BlockSpec((rt, LANES), in_map),
                    pl.BlockSpec((rt, LANES), in_map),
                ],
                out_specs=pl.BlockSpec((1, st, LANES), lambda s, j: (s, 0, 0)),
            ),
            compiler_params=pltpu.CompilerParams(
                dimension_semantics=("parallel", "arbitrary"),
                vmem_limit_bytes=vmem_limit,
            ),
            cost_estimate=pl.CostEstimate(
                flops=7 * n_main,
                transcendentals=3 * n_main,
                bytes_accessed=(diff.dtype.itemsize + weight.dtype.itemsize) * n_main),
        )(d2, w2)

        total = total + jnp.sum(partials)

    # Misaligned tail (< ~2 blocks): plain jnp, no padding / extra HBM copy.
    if n_main < n:
        d_t = d_flat[n_main:].astype(jnp.float32)
        w_t = w_flat[n_main:].astype(jnp.float32)
        eps2 = jnp.exp(w_t * _C1 + _C2)
        total = total + jnp.sum(jnp.exp((w_t * 0.5) * jnp.log(d_t * d_t + eps2)))

    return total / jnp.float32(n)


def _reference(diff, weight):
    diff = diff.astype(jnp.float32)
    weight = weight.astype(jnp.float32)
    alpha = weight / 2.0
    epsilon = 10.0 ** (-(10.0 * weight - 1.0) / 3.0)
    return jnp.mean((diff ** 2 + epsilon ** 2) ** alpha)


if __name__ == "__main__":
    key = jax.random.PRNGKey(0)
    k1, k2 = jax.random.split(key)

    # NCHW like the PyTorch module would receive.
    shape = (2, 4, 16, 16)
    diff = jax.random.normal(k1, shape, dtype=jnp.float32)
    # weight in (0, 1): typical adaptive per-pixel weight.
    weight = jax.random.uniform(k2, shape, dtype=jnp.float32, minval=0.1, maxval=0.9)

    loss = jax.block_until_ready(charbonnier_ada(diff, weight))
    ref = _reference(diff, weight)
    assert jnp.allclose(loss, ref, rtol=1e-5, atol=1e-6), (loss, ref)

    # Misaligned shape: exercises both the kernel path and the jnp tail path.
    shape2 = (1, 3, 33, 35)
    d2 = jax.random.normal(k1, shape2, dtype=jnp.float32)
    w2 = jax.random.uniform(k2, shape2, dtype=jnp.float32, minval=0.1, maxval=0.9)
    loss2 = jax.block_until_ready(charbonnier_ada(d2, w2))
    assert jnp.allclose(loss2, _reference(d2, w2), rtol=1e-5, atol=1e-6), (loss2,)

    print("KERNEL_OK")
</pallas_src>

<mosaic_0001>
module attributes {stable_mosaic.version = 11 : i64} {
  func.func @_charbonnier_kernel(%arg0: i32, %arg1: i32, %arg2: memref<16x128xf32, #tpu.memory_space<vmem>>, %arg3: memref<16x128xf32, #tpu.memory_space<vmem>>, %arg4: memref<1x16x128xf32, #tpu.memory_space<vmem>>) attributes {dimension_semantics = [#tpu.dimension_semantics<parallel>, #tpu.dimension_semantics<arbitrary>], iteration_bounds = array<i64: 1, 1>, scalar_prefetch = 0 : i64, scratch_operands = 0 : i64, tpu.core_type = #tpu.core_type<tc>, window_params = [{transform_indices = @transform_0, window_bounds = array<i64: 16, 128>}, {transform_indices = @transform_1, window_bounds = array<i64: 16, 128>}, {transform_indices = @transform_2, window_bounds = array<i64: 1, 16, 128>}]} {
    %c0_i32 = arith.constant 0 : i32
    %0 = arith.cmpi eq, %arg1, %c0_i32 : i32
    %1 = arith.extui %0 : i1 to i32
    %c0_i32_0 = arith.constant 0 : i32
    %2 = arith.cmpi ne, %1, %c0_i32_0 : i32
    scf.if %2 {
      %cst_13 = arith.constant 0.000000e+00 : f32
      %29 = vector.broadcast %cst_13 : f32 to vector<1x16x128xf32>
      %c0_14 = arith.constant 0 : index
      %c0_15 = arith.constant 0 : index
      %c0_16 = arith.constant 0 : index
      %30 = vector.load %arg4[%c0_14, %c0_15, %c0_16] : memref<1x16x128xf32, #tpu.memory_space<vmem>>, vector<1x16x128xf32>
      tpu.vector_store %arg4[%c0_14, %c0_15, %c0_16], %29 {strides = array<i32>} : memref<1x16x128xf32, #tpu.memory_space<vmem>>, vector<1x16x128xf32>,
    } else {
    }
    %c0_i32_1 = arith.constant 0 : i32
    %c1_i32 = arith.constant 1 : i32
    %3 = arith.muli %c0_i32_1, %c1_i32 : i32
    %c0_i32_2 = arith.constant 0 : i32
    %4 = arith.addi %c0_i32_2, %3 : i32
    %c16_i32 = arith.constant 16 : i32
    %5 = arith.muli %4, %c16_i32 : i32
    %6 = tpu.assume_multiple %5, 16 : i32
    %7 = arith.index_cast %6 : i32 to index
    %c0 = arith.constant 0 : index
    %8 = vector.load %arg2[%7, %c0] : memref<16x128xf32, #tpu.memory_space<vmem>>, vector<16x128xf32>
    %9 = arith.index_cast %6 : i32 to index
    %c0_3 = arith.constant 0 : index
    %10 = vector.load %arg3[%9, %c0_3] : memref<16x128xf32, #tpu.memory_space<vmem>>, vector<16x128xf32>
    %cst = arith.constant 5.000000e-01 : f32
    %11 = vector.broadcast %cst : f32 to vector<16x128xf32>
    %12 = arith.mulf %10, %11 : vector<16x128xf32>
    %cst_4 = arith.constant -15.3505669 : f32
    %13 = vector.broadcast %cst_4 : f32 to vector<16x128xf32>
    %14 = arith.mulf %10, %13 : vector<16x128xf32>
    %cst_5 = arith.constant 1.53505671 : f32
    %15 = vector.broadcast %cst_5 : f32 to vector<16x128xf32>
    %16 = arith.addf %14, %15 : vector<16x128xf32>
    %17 = math.exp %16 : vector<16x128xf32>
    %18 = arith.mulf %8, %8 : vector<16x128xf32>
    %19 = arith.addf %18, %17 : vector<16x128xf32>
    %20 = math.log %19 : vector<16x128xf32>
    %21 = arith.mulf %12, %20 : vector<16x128xf32>
    %22 = math.exp %21 : vector<16x128xf32>
    %c0_6 = arith.constant 0 : index
    %c0_7 = arith.constant 0 : index
    %c0_8 = arith.constant 0 : index
    %23 = vector.load %arg4[%c0_6, %c0_7, %c0_8] : memref<1x16x128xf32, #tpu.memory_space<vmem>>, vector<1x16x128xf32>
    %24 = vector.shape_cast %23 : vector<1x16x128xf32> to vector<16x128xf32>
    %25 = arith.addf %24, %22 : vector<16x128xf32>
    %c0_9 = arith.constant 0 : index
    %c0_10 = arith.constant 0 : index
    %c0_11 = arith.constant 0 : index
    %26 = vector.load %arg4[%c0_9, %c0_10, %c0_11] : memref<1x16x128xf32, #tpu.memory_space<vmem>>, vector<1x16x128xf32>
    %27 = vector.shape_cast %26 : vector<1x16x128xf32> to vector<16x128xf32>
    %28 = vector.shape_cast %25 : vector<16x128xf32> to vector<1x16x128xf32>
    tpu.vector_store %arg4[%c0_9, %c0_10, %c0_11], %28 {strides = array<i32>} : memref<1x16x128xf32, #tpu.memory_space<vmem>>, vector<1x16x128xf32>,
    %c1_i32_12 = arith.constant 1 : i32
    return
  }
  func.func @transform_0(%arg0: i32, %arg1: i32) -> (i32, i32) {
    %c1_i32 = arith.constant 1 : i32
    %0 = arith.muli %arg0, %c1_i32 : i32
    %1 = arith.addi %0, %arg1 : i32
    %c0_i32 = arith.constant 0 : i32
    %c0_i32_0 = arith.constant 0 : i32
    return %1, %c0_i32 : i32, i32
  }
  func.func @transform_1(%arg0: i32, %arg1: i32) -> (i32, i32) {
    %c1_i32 = arith.constant 1 : i32
    %0 = arith.muli %arg0, %c1_i32 : i32
    %1 = arith.addi %0, %arg1 : i32
    %c0_i32 = arith.constant 0 : i32
    %c0_i32_0 = arith.constant 0 : i32
    return %1, %c0_i32 : i32, i32
  }
  func.func @transform_2(%arg0: i32, %arg1: i32) -> (i32, i32, i32) {
    %c0_i32 = arith.constant 0 : i32
    %c0_i32_0 = arith.constant 0 : i32
    %c0_i32_1 = arith.constant 0 : i32
    return %arg0, %c0_i32, %c0_i32_0 : i32, i32, i32
  }
}

</mosaic_0001>

<llo_original>
// kernel: tpu_custom_call.1
$region0: #{tpu_custom_call.1}
  #allocation0 [shape = 'u32[]', space=smem, size = 0x4, offset = 0x4, fixed_abs, tag = 'smem constant byte address 0x4 - core index']
  #allocation1 [shape = 'u32[144,128]{1,0:T(1,128)}', space=vmem, size = 0x12000, scoped, tag = 'internal scratch']
  %s0 = inlined_call_operand.hbm [shape: f32[16,128], index: 0, kind: input, shape index: {}]
  %s1 = inlined_call_operand.hbm [shape: f32[16,128], index: 1, kind: input, shape index: {}]
  %s2 = inlined_call_operand.hbm [shape: f32[1,16,128], index: 2, kind: output, shape index: {}]
  %s3 = sld [smem:[#allocation0]]
  $region30: #{tpu_custom_call.1} parent=0
    _
  %s5 = ssub.s32 1, %s3
  %s6 = scalar_select 0, %s5, %s3
  $region1: #{tpu_custom_call.1} parent=0
    #allocation2 [shape = 'u8[8192]{0}', space=vmem, size = 0x2000, scoped, tag = 'input window, operand 0, single buffered']
    #allocation3 [shape = 's32[1]{0}', space=sflag, size = 0x4, scoped, tag = 'scoped memory for tpu_custom_call.1']
    #allocation4 [shape = 's32[1]{0}', space=sflag, size = 0x4, scoped, tag = 'scoped memory for tpu_custom_call.1']
    #allocation5 [shape = 'u8[8192]{0}', space=vmem, size = 0x2000, scoped, tag = 'input window, operand 1, single buffered']
    #allocation6 [shape = 's32[1]{0}', space=sflag, size = 0x4, scoped, tag = 'scoped memory for tpu_custom_call.1']
    #allocation7 [shape = 'u8[8192]{0}', space=vmem, size = 0x2000, scoped, tag = 'output window, operand 0, single buffered']
    %7 = vsyncpa [#allocation3], 0
    %8 = vsyncpa [#allocation6], 0
    %9 = vsyncpa [#allocation4], 0
    // Predicated region
    $region2: #{tpu_custom_call.1} parent=1 // pred_check
      _
    $region3: #{tpu_custom_call.1} parent=1 // pred_check_branch
      %11 = sbr.rel (0) target = $region5
    $region4: #{tpu_custom_call.1} parent=1 // pred_region
      %s12 = sadd.s32 0, 0
      %s13 = smul.u32 2, %s12
      %s15 = ssub.s32 256, 256
      %16 = vsyncadd [#allocation3], %s15
      %s17 = smul.addr %s13, 128
      %s18 = scalar_lea.hbm %s0, %s17
      %s19 = sshll.u32 [#allocation2], 4
      %s20 = int_to_ptr.vmem [resolvable:$true] %s19
      %25 = dma.hbm_to_vmem [thread:$0]  %s18, 256, %s20, [#allocation3], 128, 128, 8
    $region5: #{tpu_custom_call.1} parent=1 // pred_fallthru
      _
    // Predicated region
    $region6: #{tpu_custom_call.1} parent=1 // pred_check
      _
    $region7: #{tpu_custom_call.1} parent=1 // pred_check_branch
      %27 = sbr.rel (0) target = $region9
    $region8: #{tpu_custom_call.1} parent=1 // pred_region
      %s28 = sadd.s32 0, 0
      %s29 = smul.u32 2, %s28
      %s31 = ssub.s32 256, 256
      %32 = vsyncadd [#allocation6], %s31
      %s33 = smul.addr %s29, 128
      %s34 = scalar_lea.hbm %s1, %s33
      %s35 = sshll.u32 [#allocation5], 4
      %s36 = int_to_ptr.vmem [resolvable:$true] %s35
      %41 = dma.hbm_to_vmem [thread:$0]  %s34, 256, %s36, [#allocation6], 128, 128, 8
    $region9: #{tpu_custom_call.1} parent=1 // pred_fallthru
      _
    // Predicated region
    $region10: #{tpu_custom_call.1} parent=1 // pred_check
      _
    $region11: #{tpu_custom_call.1} parent=1 // pred_check_branch
      %43 = sbr.rel (0) target = $region13
    $region12: #{tpu_custom_call.1} parent=1 // pred_region
      %44 = dma.done [#allocation3], 256
    $region13: #{tpu_custom_call.1} parent=1 // pred_fallthru
      _
    // Predicated region
    $region14: #{tpu_custom_call.1} parent=1 // pred_check
      _
    $region15: #{tpu_custom_call.1} parent=1 // pred_check_branch
      %46 = sbr.rel (0) target = $region17
    $region16: #{tpu_custom_call.1} parent=1 // pred_region
      %47 = dma.done [#allocation6], 256
    $region17: #{tpu_custom_call.1} parent=1 // pred_fallthru
      _
    %s48 = sadd.s32 0, 0
    %s49 = smul.u32 2, %s48
    %s50 = sadd.s32 0, 0
    %s51 = smul.u32 2, %s50
    %p52 = scmp.eq.s32.totalorder 0, 0
    // Predicated region
    $region18: #{tpu_custom_call.1} parent=1 // pred_check
      %p53 = pneg %p52
    $region19: #{tpu_custom_call.1} parent=1 // pred_check_branch
      %55 = sbr.rel (%p53) target = $region21
    $region20: #{tpu_custom_call.1} parent=1 // pred_region
      %56 = vst [vmem:[#allocation7] sm:$0xff] 0.0
      %57 = vst [vmem:[#allocation7 + $0x8] sm:$0xff] 0.0
    $region21: #{tpu_custom_call.1} parent=1 // pred_fallthru
      _
    %v58 = vld [vmem:[#allocation2] sm:$0xff]
    %v59 = vld [vmem:[#allocation2 + $0x8] sm:$0xff]
    %v60 = vld [vmem:[#allocation5] sm:$0xff]
    %v61 = vld [vmem:[#allocation5 + $0x8] sm:$0xff]
    %v62 = vmul.f32 %v60, 0.5
    %v63 = vmul.f32 %v61, 0.5
    %v64 = vmul.f32 %v60, -15.350567
    %v65 = vmul.f32 %v61, -15.350567
    %v66 = vadd.f32 %v64, 1.5350567
    %v67 = vadd.f32 %v65, 1.5350567
    %v68 = vmul.f32 %v66, 1.442695
    %v69 = vpow.pop %v68
    %v70 = vmul.f32 %v67, 1.442695
    %v71 = vpow.pop %v70
    %v72 = vmul.f32 %v58, %v58
    %v73 = vmul.f32 %v59, %v59
    %v74 = vadd.f32 %v72, %v69
    %v75 = vadd.f32 %v73, %v71
    %v76 = vlog2.pop %v74
    %v77 = vmul.f32 %v76, 0.6931472
    %v78 = vlog2.pop %v75
    %v79 = vmul.f32 %v78, 0.6931472
    %v80 = vmul.f32 %v62, %v77
    %v81 = vmul.f32 %v63, %v79
    %v82 = vmul.f32 %v80, 1.442695
    %v83 = vpow.pop %v82
    %v84 = vmul.f32 %v81, 1.442695
    %v85 = vpow.pop %v84
    %v86 = vld [vmem:[#allocation7] sm:$0xff]
    %v87 = vld [vmem:[#allocation7 + $0x8] sm:$0xff]
    %v88 = vadd.f32 %v86, %v83
    %v89 = vadd.f32 %v87, %v85
    %90 = vst [vmem:[#allocation7] sm:$0xff] %v88
    %91 = vst [vmem:[#allocation7 + $0x8] sm:$0xff] %v89
    // Predicated region
    $region22: #{tpu_custom_call.1} parent=1 // pred_check
      _
    $region23: #{tpu_custom_call.1} parent=1 // pred_check_branch
      %93 = sbr.rel (0) target = $region25
    $region24: #{tpu_custom_call.1} parent=1 // pred_region
      %s95 = ssub.s32 256, 256
      %96 = vsyncadd [#allocation4], %s95
      %s97 = sshll.u32 [#allocation7], 4
      %s98 = int_to_ptr.vmem [resolvable:$true] %s97
      %103 = dma.vmem_to_hbm [thread:$0]  %s98, 256, %s2, [#allocation4], 128, 128, 8
    $region25: #{tpu_custom_call.1} parent=1 // pred_fallthru
      _
    // Predicated region
    $region26: #{tpu_custom_call.1} parent=1 // pred_check
      _
    $region27: #{tpu_custom_call.1} parent=1 // pred_check_branch
      %105 = sbr.rel (0) target = $region29
    $region28: #{tpu_custom_call.1} parent=1 // pred_region
      %106 = dma.done [#allocation4], 256
    $region29: #{tpu_custom_call.1} parent=1 // pred_fallthru
      _
    %107 = vsyncpa [#allocation3], 1
    %108 = vsyncpa [#allocation6], 1
    %109 = vsyncpa [#allocation4], 1

</llo_original>
